<compile_context>
chip_gen: v6e
topology: v6e:2x2x1
jax: 0.10.0
libtpu: 0.0.40
codegen_flags: <defaults>
</compile_context>

<pallas_src>
import math

import jax
import jax.numpy as jnp
from jax.experimental import pallas as pl
from jax.experimental.pallas import tpu as pltpu


def _round_up(x, m):
    return ((x + m - 1) // m) * m


# --------------------- Stage 1: H = feat @ W (projection) ---------------------
def _proj_kernel(feat_ref, w_ref, h_ref):
    h_ref[...] = jnp.dot(
        feat_ref[...], w_ref[...], preferred_element_type=jnp.float32
    ).astype(h_ref.dtype)


# ----------------- Stage 2: out = adj @ H (aggregation, K-tiled) --------------
def _agg_kernel(adj_ref, h_ref, out_ref, acc_ref):
    k = pl.program_id(1)

    @pl.when(k == 0)
    def _():
        acc_ref[...] = jnp.zeros_like(acc_ref)

    acc_ref[...] += jnp.dot(
        adj_ref[...], h_ref[...], preferred_element_type=jnp.float32
    )

    @pl.when(k == pl.num_programs(1) - 1)
    def _():
        out_ref[...] = acc_ref[...].astype(out_ref.dtype)


def encoder_forward(feat, adj, weight, *, tile_m=256, tile_k=512):
    """Pallas equivalent of Encoder.forward: adj @ (feat @ weight)."""
    n, in_feat = feat.shape
    in_feat_w, out_feat = weight.shape
    assert in_feat == in_feat_w
    assert adj.shape == (n, n)

    f32 = jnp.float32
    feat = feat.astype(f32)
    adj = adj.astype(f32)
    weight = weight.astype(f32)
    # Note: adj/H could be cast to bfloat16 (f32 accumulation) to halve HBM
    # traffic if model accuracy permits; kept f32 to match reference exactly.

    # Lane-dense latent width: pad out_feat up to a multiple of 128 so output
    # stores are full-lane (no masked vst). Extra columns are zero and sliced off.
    out_p = _round_up(out_feat, 128)

    # Tile choice for the node dimension.
    if n <= max(tile_m, tile_k):
        # Small problem: single grid step with the whole thing in one block.
        n_p = _round_up(n, 128)
        tm = tk = n_p
    else:
        n_p = _round_up(n, math.lcm(tile_m, tile_k))
        tm, tk = tile_m, tile_k

    # Zero-pad inputs to the tiled shapes (padding contributes nothing).
    feat_p = feat if n_p == n else jnp.zeros((n_p, in_feat), f32).at[:n, :].set(feat)
    adj_p = adj if n_p == n else jnp.zeros((n_p, n_p), f32).at[:n, :n].set(adj)
    w_p = (
        weight
        if out_p == out_feat
        else jnp.zeros((in_feat, out_p), f32).at[:, :out_feat].set(weight)
    )

    vmem_limit = 32 * 1024 * 1024

    # ---- Stage 1: H = feat @ W ------------------------------------------------
    h = pl.pallas_call(
        _proj_kernel,
        out_shape=jax.ShapeDtypeStruct((n_p, out_p), f32),
        grid_spec=pltpu.PrefetchScalarGridSpec(
            num_scalar_prefetch=0,
            grid=(n_p // tm,),
            in_specs=[
                pl.BlockSpec((tm, in_feat), lambda i: (i, 0)),
                pl.BlockSpec((in_feat, out_p), lambda i: (0, 0)),
            ],
            out_specs=pl.BlockSpec((tm, out_p), lambda i: (i, 0)),
        ),
        compiler_params=pltpu.CompilerParams(
            dimension_semantics=("parallel",),
            vmem_limit_bytes=vmem_limit,
        ),
    )(feat_p, w_p)

    # ---- Stage 2: out = adj @ H  (M parallel, K sequential accumulation) ------
    out_padded = pl.pallas_call(
        _agg_kernel,
        out_shape=jax.ShapeDtypeStruct((n_p, out_p), f32),
        grid_spec=pltpu.PrefetchScalarGridSpec(
            num_scalar_prefetch=0,
            grid=(n_p // tm, n_p // tk),
            in_specs=[
                pl.BlockSpec((tm, tk), lambda i, k: (i, k)),
                pl.BlockSpec((tk, out_p), lambda i, k: (k, 0)),
            ],
            out_specs=pl.BlockSpec((tm, out_p), lambda i, k: (i, 0)),
            scratch_shapes=[pltpu.VMEM((tm, out_p), f32)],
        ),
        compiler_params=pltpu.CompilerParams(
            dimension_semantics=("parallel", "arbitrary"),
            vmem_limit_bytes=vmem_limit,
        ),
    )(adj_p, h)

    return out_padded[:n, :out_feat]


def xavier_uniform(key, shape, dtype=jnp.float32):
    """Matches torch.nn.init.xavier_uniform_ for a 2-D weight."""
    fan_in, fan_out = shape
    bound = (6.0 / (fan_in + fan_out)) ** 0.5
    return jax.random.uniform(key, shape, dtype=dtype, minval=-bound, maxval=bound)


if __name__ == "__main__":
    # Small, module-consistent shapes.
    N = 128        # number of nodes / rows of feat & adj
    IN_FEAT = 64   # input feature dim
    OUT_FEAT = 32  # latent dim

    key = jax.random.PRNGKey(0)
    k_w, k_feat, k_adj = jax.random.split(key, 3)

    # Deterministic parameter init (Encoder.reset_parameters -> xavier_uniform_)
    weight = xavier_uniform(k_w, (IN_FEAT, OUT_FEAT))

    feat = jax.random.normal(k_feat, (N, IN_FEAT), dtype=jnp.float32)
    # Dense row-normalized "adjacency" (torch.spmm on a dense-equivalent matrix)
    adj_raw = jax.random.uniform(k_adj, (N, N), dtype=jnp.float32)
    adj = adj_raw / jnp.sum(adj_raw, axis=1, keepdims=True)

    out = encoder_forward(feat, adj, weight)
    out = jax.block_until_ready(out)

    # Reference check in plain JAX (same semantics as torch.mm + torch.spmm).
    ref = adj @ (feat @ weight)
    assert out.shape == (N, OUT_FEAT)
    assert jnp.allclose(out, ref, atol=1e-4, rtol=1e-4)

    print("KERNEL_OK")
</pallas_src>

<mosaic_0001>
module attributes {stable_mosaic.version = 11 : i64} {
  func.func @_proj_kernel(%arg0: i32, %arg1: memref<128x64xf32, #tpu.memory_space<vmem>>, %arg2: memref<64x128xf32, #tpu.memory_space<vmem>>, %arg3: memref<128x128xf32, #tpu.memory_space<vmem>>) attributes {dimension_semantics = [#tpu.dimension_semantics<parallel>], iteration_bounds = array<i64: 1>, scalar_prefetch = 0 : i64, scratch_operands = 0 : i64, tpu.core_type = #tpu.core_type<tc>, window_params = [{transform_indices = @transform_0, window_bounds = array<i64: 128, 64>}, {pipeline_mode = #tpu.pipeline_mode<synchronous>, transform_indices = @transform_1, window_bounds = array<i64: 64, 128>}, {transform_indices = @transform_2, window_bounds = array<i64: 128, 128>}]} {
    %c0 = arith.constant 0 : index
    %c0_0 = arith.constant 0 : index
    %0 = vector.load %arg1[%c0, %c0_0] : memref<128x64xf32, #tpu.memory_space<vmem>>, vector<128x64xf32>
    %c0_1 = arith.constant 0 : index
    %c0_2 = arith.constant 0 : index
    %1 = vector.load %arg2[%c0_1, %c0_2] : memref<64x128xf32, #tpu.memory_space<vmem>>, vector<64x128xf32>
    %cst = arith.constant dense<0.000000e+00> : vector<128x128xf32>
    %2 = tpu.matmul %0, %1, %cst {dimension_numbers = #tpu.dot_dimension_numbers<[1], [0], [0], [1], [0, 0, 1, 1], [], []>} : vector<128x64xf32>, vector<64x128xf32>, vector<128x128xf32> -> vector<128x128xf32>
    %c0_3 = arith.constant 0 : index
    %c0_4 = arith.constant 0 : index
    %3 = vector.load %arg3[%c0_3, %c0_4] : memref<128x128xf32, #tpu.memory_space<vmem>>, vector<128x128xf32>
    tpu.vector_store %arg3[%c0_3, %c0_4], %2 {strides = array<i32>} : memref<128x128xf32, #tpu.memory_space<vmem>>, vector<128x128xf32>,
    return
  }
  func.func @transform_0(%arg0: i32) -> (i32, i32) {
    %c0_i32 = arith.constant 0 : i32
    %c0_i32_0 = arith.constant 0 : i32
    return %arg0, %c0_i32 : i32, i32
  }
  func.func @transform_1(%arg0: i32) -> (i32, i32) {
    %c0_i32 = arith.constant 0 : i32
    %c0_i32_0 = arith.constant 0 : i32
    %c0_i32_1 = arith.constant 0 : i32
    return %c0_i32, %c0_i32_0 : i32, i32
  }
  func.func @transform_2(%arg0: i32) -> (i32, i32) {
    %c0_i32 = arith.constant 0 : i32
    %c0_i32_0 = arith.constant 0 : i32
    return %arg0, %c0_i32 : i32, i32
  }
}

</mosaic_0001>

<llo_original>
// kernel: tpu_custom_call.1
$region0: #{tpu_custom_call.1}
  #allocation0 [shape = 'u32[]', space=smem, size = 0x4, offset = 0x4, fixed_abs, tag = 'smem constant byte address 0x4 - core index']
  #allocation1 [shape = 'u32[144,128]{1,0:T(1,128)}', space=vmem, size = 0x12000, scoped, tag = 'internal scratch']
  %s0 = inlined_call_operand.vmem [shape: f32[128,64], index: 0, kind: input, shape index: {}]
  %s1 = inlined_call_operand.vmem [shape: f32[64,128], index: 1, kind: input, shape index: {}]
  %s2 = inlined_call_operand.hbm [shape: f32[128,128], index: 2, kind: output, shape index: {}]
  %s3 = sld [smem:[#allocation0]]
  $region18: #{tpu_custom_call.1} parent=0
    _
  %s5 = ssub.s32 1, %s3
  %s6 = scalar_select 0, %s5, %s3
  $region1: #{tpu_custom_call.1} parent=0
    #allocation2 [shape = 'u8[65536]{0}', space=vmem, size = 0x10000, scoped, tag = 'output window, operand 0, single buffered']
    #allocation3 [shape = 's32[1]{0}', space=sflag, size = 0x4, scoped, tag = 'scoped memory for tpu_custom_call.1']
    %7 = vsyncpa [#allocation3], 0
    // Predicated region
    $region2: #{tpu_custom_call.1} parent=1 // pred_check
      _
    $region3: #{tpu_custom_call.1} parent=1 // pred_check_branch
      %9 = sbr.rel (0) target = $region5
    $region4: #{tpu_custom_call.1} parent=1 // pred_region
      _
    $region5: #{tpu_custom_call.1} parent=1 // pred_fallthru
      _
    // Predicated region
    $region6: #{tpu_custom_call.1} parent=1 // pred_check
      _
    $region7: #{tpu_custom_call.1} parent=1 // pred_check_branch
      %11 = sbr.rel (0) target = $region9
    $region8: #{tpu_custom_call.1} parent=1 // pred_region
      _
    $region9: #{tpu_custom_call.1} parent=1 // pred_fallthru
      _
    %v12 = vld [vmem:[%s0] sm:$0xff]
    %v13 = vld [vmem:[%s0 + $0x8] sm:$0xff]
    %v14 = vld [vmem:[%s0 + $0x10] sm:$0xff]
    %v15 = vld [vmem:[%s0 + $0x18] sm:$0xff]
    %v16 = vld [vmem:[%s0 + $0x20] sm:$0xff]
    %v17 = vld [vmem:[%s0 + $0x28] sm:$0xff]
    %v18 = vld [vmem:[%s0 + $0x30] sm:$0xff]
    %v19 = vld [vmem:[%s0 + $0x38] sm:$0xff]
    %v20 = vld [vmem:[%s0 + $0x40] sm:$0xff]
    %v21 = vld [vmem:[%s0 + $0x48] sm:$0xff]
    %v22 = vld [vmem:[%s0 + $0x50] sm:$0xff]
    %v23 = vld [vmem:[%s0 + $0x58] sm:$0xff]
    %v24 = vld [vmem:[%s0 + $0x60] sm:$0xff]
    %v25 = vld [vmem:[%s0 + $0x68] sm:$0xff]
    %v26 = vld [vmem:[%s0 + $0x70] sm:$0xff]
    %v27 = vld [vmem:[%s0 + $0x78] sm:$0xff]
    %v28 = vld [vmem:[%s1] sm:$0xff]
    %v29 = vld [vmem:[%s1 + $0x8] sm:$0xff]
    %v30 = vld [vmem:[%s1 + $0x10] sm:$0xff]
    %v31 = vld [vmem:[%s1 + $0x18] sm:$0xff]
    %v32 = vld [vmem:[%s1 + $0x20] sm:$0xff]
    %v33 = vld [vmem:[%s1 + $0x28] sm:$0xff]
    %v34 = vld [vmem:[%s1 + $0x30] sm:$0xff]
    %v35 = vld [vmem:[%s1 + $0x38] sm:$0xff]
    %vm36 = vcmask 523264
    %v38 = vsel %vm36, %v12, 0
    %v41 = vsel %vm36, %v13, 0
    %v44 = vsel %vm36, %v14, 0
    %v47 = vsel %vm36, %v15, 0
    %v50 = vsel %vm36, %v16, 0
    %v53 = vsel %vm36, %v17, 0
    %v56 = vsel %vm36, %v18, 0
    %v59 = vsel %vm36, %v19, 0
    %v62 = vsel %vm36, %v20, 0
    %v65 = vsel %vm36, %v21, 0
    %v68 = vsel %vm36, %v22, 0
    %v71 = vsel %vm36, %v23, 0
    %v74 = vsel %vm36, %v24, 0
    %v77 = vsel %vm36, %v25, 0
    %v80 = vsel %vm36, %v26, 0
    %v83 = vsel %vm36, %v27, 0
    %85 = vmatprep.subr.mxu0 0.0
    %86 = vmatpush1.msra.mxu0 0.0
    %87 = vmatprep.subr.mxu0 0.0
    %88 = vmatpush1.msra.mxu0 0.0
    %89 = vmatprep.subr.mxu0 0.0
    %90 = vmatpush1.msra.mxu0 0.0
    %91 = vmatprep.subr.mxu0 0.0
    %92 = vmatpush1.msra.mxu0 0.0
    %93 = vmatprep.subr.mxu0 0.0
    %94 = vmatpush1.msra.mxu0 0.0
    %95 = vmatprep.subr.mxu0 0.0
    %96 = vmatpush1.msra.mxu0 0.0
    %97 = vmatprep.subr.mxu0 0.0
    %98 = vmatpush1.msra.mxu0 0.0
    %99 = vmatprep.subr.mxu0 0.0
    %100 = vmatpush1.msra.mxu0 0.0
    %101 = vmatprep.subr.mxu0 0.0
    %102 = vmatpush1.msra.mxu0 %v35
    %103 = vmatprep.subr.mxu0 0.0
    %104 = vmatpush1.msra.mxu0 %v34
    %105 = vmatprep.subr.mxu0 0.0
    %106 = vmatpush1.msra.mxu0 %v33
    %107 = vmatprep.subr.mxu0 0.0
    %108 = vmatpush1.msra.mxu0 %v32
    %109 = vmatprep.subr.mxu0 0.0
    %110 = vmatpush1.msra.mxu0 %v31
    %111 = vmatprep.subr.mxu0 0.0
    %112 = vmatpush1.msra.mxu0 %v30
    %113 = vmatprep.subr.mxu0 0.0
    %114 = vmatpush1.msra.mxu0 %v29
    %115 = vmatprep.subr.mxu0 0.0
    %116 = vmatpush1.msra.mxu0 %v28
    %117 = vmatprep.subr.mxu0 0.0
    %118 = vmatpush2.msra.mxu0 0.0
    %119 = vmatprep.subr.mxu0 0.0
    %120 = vmatpush2.msra.mxu0 0.0
    %121 = vmatprep.subr.mxu0 0.0
    %122 = vmatpush2.msra.mxu0 0.0
    %123 = vmatprep.subr.mxu0 0.0
    %124 = vmatpush2.msra.mxu0 0.0
    %125 = vmatprep.subr.mxu0 0.0
    %126 = vmatpush2.msra.mxu0 0.0
    %127 = vmatprep.subr.mxu0 0.0
    %128 = vmatpush2.msra.mxu0 0.0
    %129 = vmatprep.subr.mxu0 0.0
    %130 = vmatpush2.msra.mxu0 0.0
    %131 = vmatprep.subr.mxu0 0.0
    %132 = vmatpush2.msra.mxu0 0.0
    %133 = vmatprep.subr.mxu0 0.0
    %134 = vmatpush2.msra.mxu0 0.0
    %135 = vmatprep.subr.mxu0 0.0
    %136 = vmatpush2.msra.mxu0 0.0
    %137 = vmatprep.subr.mxu0 0.0
    %138 = vmatpush2.msra.mxu0 0.0
    %139 = vmatprep.subr.mxu0 0.0
    %140 = vmatpush2.msra.mxu0 0.0
    %141 = vmatprep.subr.mxu0 0.0
    %142 = vmatpush2.msra.mxu0 0.0
    %143 = vmatprep.subr.mxu0 0.0
    %144 = vmatpush2.msra.mxu0 0.0
    %145 = vmatprep.subr.mxu0 0.0
    %146 = vmatpush2.msra.mxu0 0.0
    %147 = vmatprep.subr.mxu0 0.0
    %148 = vmatpush2.msra.mxu0 0.0
    %149 = vmatprep.mubr.f32.mxu0 0.0
    %150 = vmatmul.mubr.f32.gmra.mxu0 %v38
    %v151 = vpop.f32.mrf.mxu0
    %v152 = vadd.f32 0.0, %v151
    %v153 = vpop.f32.mrf.mxu0
    %154 = vmatprep.mubr.f32.mxu0 0.0
    %155 = vmatmul.mubr.f32.gmra.mxu0 %v41
    %v156 = vpop.f32.mrf.mxu0
    %v157 = vadd.f32 0.0, %v156
    %v158 = vpop.f32.mrf.mxu0
    %159 = vmatprep.mubr.f32.mxu0 0.0
    %160 = vmatmul.mubr.f32.gmra.mxu0 %v44
    %v161 = vpop.f32.mrf.mxu0
    %v162 = vadd.f32 0.0, %v161
    %v163 = vpop.f32.mrf.mxu0
    %164 = vmatprep.mubr.f32.mxu0 0.0
    %165 = vmatmul.mubr.f32.gmra.mxu0 %v47
    %v166 = vpop.f32.mrf.mxu0
    %v167 = vadd.f32 0.0, %v166
    %v168 = vpop.f32.mrf.mxu0
    %169 = vmatprep.mubr.f32.mxu0 0.0
    %170 = vmatmul.mubr.f32.gmra.mxu0 %v50
    %v171 = vpop.f32.mrf.mxu0
    %v172 = vadd.f32 0.0, %v171
    %v173 = vpop.f32.mrf.mxu0
    %174 = vmatprep.mubr.f32.mxu0 0.0
    %175 = vmatmul.mubr.f32.gmra.mxu0 %v53
    %v176 = vpop.f32.mrf.mxu0
    %v177 = vadd.f32 0.0, %v176
    %v178 = vpop.f32.mrf.mxu0
    %179 = vmatprep.mubr.f32.mxu0 0.0
    %180 = vmatmul.mubr.f32.gmra.mxu0 %v56
    %v181 = vpop.f32.mrf.mxu0
    %v182 = vadd.f32 0.0, %v181
    %v183 = vpop.f32.mrf.mxu0
    %184 = vmatprep.mubr.f32.mxu0 0.0
    %185 = vmatmul.mubr.f32.gmra.mxu0 %v59
    %v186 = vpop.f32.mrf.mxu0
    %v187 = vadd.f32 0.0, %v186
    %v188 = vpop.f32.mrf.mxu0
    %189 = vmatprep.mubr.f32.mxu0 0.0
    %190 = vmatmul.mubr.f32.gmra.mxu0 %v62
    %v191 = vpop.f32.mrf.mxu0
    %v192 = vadd.f32 0.0, %v191
    %v193 = vpop.f32.mrf.mxu0
    %194 = vmatprep.mubr.f32.mxu0 0.0
    %195 = vmatmul.mubr.f32.gmra.mxu0 %v65
    %v196 = vpop.f32.mrf.mxu0
    %v197 = vadd.f32 0.0, %v196
    %v198 = vpop.f32.mrf.mxu0
    %199 = vmatprep.mubr.f32.mxu0 0.0
    %200 = vmatmul.mubr.f32.gmra.mxu0 %v68
    %v201 = vpop.f32.mrf.mxu0
    %v202 = vadd.f32 0.0, %v201
    %v203 = vpop.f32.mrf.mxu0
    %204 = vmatprep.mubr.f32.mxu0 0.0
    %205 = vmatmul.mubr.f32.gmra.mxu0 %v71
    %v206 = vpop.f32.mrf.mxu0
    %v207 = vadd.f32 0.0, %v206
    %v208 = vpop.f32.mrf.mxu0
    %209 = vmatprep.mubr.f32.mxu0 0.0
    %210 = vmatmul.mubr.f32.gmra.mxu0 %v74
    %v211 = vpop.f32.mrf.mxu0
    %v212 = vadd.f32 0.0, %v211
    %v213 = vpop.f32.mrf.mxu0
    %214 = vmatprep.mubr.f32.mxu0 0.0
    %215 = vmatmul.mubr.f32.gmra.mxu0 %v77
    %v216 = vpop.f32.mrf.mxu0
    %v217 = vadd.f32 0.0, %v216
    %v218 = vpop.f32.mrf.mxu0
    %219 = vmatprep.mubr.f32.mxu0 0.0
    %220 = vmatmul.mubr.f32.gmra.mxu0 %v80
    %v221 = vpop.f32.mrf.mxu0
    %v222 = vadd.f32 0.0, %v221
    %v223 = vpop.f32.mrf.mxu0
    %224 = vmatprep.mubr.f32.mxu0 0.0
    %225 = vmatmul.mubr.f32.gmra.mxu0 %v83
    %v226 = vpop.f32.mrf.mxu0
    %v227 = vadd.f32 0.0, %v226
    %v228 = vpop.f32.mrf.mxu0
    %229 = vdwg.mxu0
    %230 = vst [vmem:[#allocation2] sm:$0xff] %v152
    %231 = vst [vmem:[#allocation2 + $0x8] sm:$0xff] %v157
    %232 = vst [vmem:[#allocation2 + $0x10] sm:$0xff] %v162
    %233 = vst [vmem:[#allocation2 + $0x18] sm:$0xff] %v167
    %234 = vst [vmem:[#allocation2 + $0x20] sm:$0xff] %v172
    %235 = vst [vmem:[#allocation2 + $0x28] sm:$0xff] %v177
    %236 = vst [vmem:[#allocation2 + $0x30] sm:$0xff] %v182
    %237 = vst [vmem:[#allocation2 + $0x38] sm:$0xff] %v187
    %238 = vst [vmem:[#allocation2 + $0x40] sm:$0xff] %v192
    %239 = vst [vmem:[#allocation2 + $0x48] sm:$0xff] %v197
    %240 = vst [vmem:[#allocation2 + $0x50] sm:$0xff] %v202
    %241 = vst [vmem:[#allocation2 + $0x58] sm:$0xff] %v207
    %242 = vst [vmem:[#allocation2 + $0x60] sm:$0xff] %v212
    %243 = vst [vmem:[#allocation2 + $0x68] sm:$0xff] %v217
    %244 = vst [vmem:[#allocation2 + $0x70] sm:$0xff] %v222
    %245 = vst [vmem:[#allocation2 + $0x78] sm:$0xff] %v227
    // Predicated region
    $region10: #{tpu_custom_call.1} parent=1 // pred_check
      _
    $region11: #{tpu_custom_call.1} parent=1 // pred_check_branch
      %247 = sbr.rel (0) target = $region13
    $region12: #{tpu_custom_call.1} parent=1 // pred_region
      %s249 = ssub.s32 2048, 2048
      %250 = vsyncadd [#allocation3], %s249
      %s251 = sshll.u32 [#allocation2], 4
      %s252 = int_to_ptr.vmem [resolvable:$true] %s251
      %257 = dma.vmem_to_hbm [thread:$0]  %s252, 2048, %s2, [#allocation3], 128, 128, 8
    $region13: #{tpu_custom_call.1} parent=1 // pred_fallthru
      _
    // Predicated region
    $region14: #{tpu_custom_call.1} parent=1 // pred_check
      _
    $region15: #{tpu_custom_call.1} parent=1 // pred_check_branch
      %259 = sbr.rel (0) target = $region17
    $region16: #{tpu_custom_call.1} parent=1 // pred_region
      %260 = dma.done [#allocation3], 2048
    $region17: #{tpu_custom_call.1} parent=1 // pred_fallthru
      _
    %261 = vsyncpa [#allocation3], 1

</llo_original>
